<compile_context>
chip_gen: v7x
topology: tpu7x:2x2x1
jax: 0.10.0
libtpu: 0.0.40
codegen_flags: <defaults>
</compile_context>

<pallas_src>
import jax
import jax.numpy as jnp
from jax.experimental import pallas as pl
from jax.experimental.pallas import tpu as pltpu


def _round_up(x: int, m: int) -> int:
    return (x + m - 1) // m * m


# Both tables combined must stay under this to take the tables-in-VMEM path.
# (Double-buffered BlockSpec inputs -> ~2x this in scoped VMEM; 16 MiB fits
# comfortably under the default scoped limits on v5e/v6e/v7x.)
_FAST_PATH_TABLE_BYTES = 8 * 1024 * 1024


def _make_vmem_gather_kernel(C: int, C8: int, D: int):
    """Small-vocab path: tables resident in VMEM, gather = dynamic row slices."""

    def kernel(tgt_ids_ref, ctx_ids_ref,      # SMEM ids: (B,), (B, C)
               emb_in_ref, emb_out_ref,       # VMEM tables: (V, D), streamed once
               out_ref,                       # VMEM out block: (1, C8)
               ctx_buf):                      # VMEM scratch: (C8, D)
        b = pl.program_id(0)
        for i in range(C):                    # C is small & static -> unrolled
            ctx_buf[pl.ds(i, 1), :] = emb_out_ref[pl.ds(ctx_ids_ref[b, i], 1), :]
        tgt_row = emb_in_ref[pl.ds(tgt_ids_ref[b], 1), :]        # (1, D)
        # Rows C..C8 of ctx_buf hold stale data; those output lanes are sliced
        # off by the wrapper, so no zero-fill is needed.
        scores = jax.lax.dot_general(
            tgt_row, ctx_buf[...],
            dimension_numbers=(((1,), (1,)), ((), ())),
            preferred_element_type=jnp.float32)                  # (1, C8)
        out_ref[...] = scores

    return kernel


def _make_hbm_gather_kernel(C: int, C8: int, D: int):
    """Large-vocab path: tables stay in HBM; C+1 single-row DMAs per step."""

    def kernel(tgt_ids_ref, ctx_ids_ref,      # SMEM ids: (B,), (B, C)
               emb_in_hbm, emb_out_hbm,       # HBM tables (pl.ANY)
               out_ref,                       # VMEM out block: (1, C8)
               tgt_buf, ctx_buf, sems):       # VMEM scratch + 2 DMA sems
        b = pl.program_id(0)

        # Target row -> its own semaphore.
        t_cp = pltpu.make_async_copy(
            emb_in_hbm.at[pl.ds(tgt_ids_ref[b], 1)], tgt_buf, sems.at[0])
        t_cp.start()

        # All context rows share one semaphore (equal-sized copies), issued
        # back-to-back before any wait.
        ctx_cps = []
        for i in range(C):
            cp = pltpu.make_async_copy(
                emb_out_hbm.at[pl.ds(ctx_ids_ref[b, i], 1)],
                ctx_buf.at[pl.ds(i, 1)],
                sems.at[1])
            cp.start()
            ctx_cps.append(cp)

        t_cp.wait()
        for cp in ctx_cps:
            cp.wait()

        scores = jax.lax.dot_general(
            tgt_buf[...], ctx_buf[...],
            dimension_numbers=(((1,), (1,)), ((), ())),
            preferred_element_type=jnp.float32)                  # (1, C8)
        out_ref[...] = scores

    return kernel


def word2vec_forward_batched(target_ids, context_ids, emb_input, emb_output,
                             *, force_hbm_gather: bool = False):
    """scores[b, c] = <emb_input[target_ids[b]], emb_output[context_ids[b, c]]>."""
    emb_input = jnp.asarray(emb_input)
    emb_output = jnp.asarray(emb_output)
    V, D = emb_input.shape

    target_ids = jnp.asarray(target_ids, jnp.int32).reshape(-1)
    context_ids = jnp.asarray(context_ids, jnp.int32)
    if context_ids.ndim == 1:
        context_ids = context_ids[None, :]
    B, C = int(context_ids.shape[0]), int(context_ids.shape[1])
    assert int(target_ids.shape[0]) == B
    C8 = _round_up(max(C, 1), 8)

    # Clamp once, vectorized (DMA / dynamic slices have no runtime bounds check).
    target_ids = jnp.clip(target_ids, 0, V - 1)
    context_ids = jnp.clip(context_ids, 0, V - 1)

    table_bytes = (emb_input.size * emb_input.dtype.itemsize
                   + emb_output.size * emb_output.dtype.itemsize)
    use_fast = (not force_hbm_gather) and table_bytes <= _FAST_PATH_TABLE_BYTES

    out_spec = pl.BlockSpec((None, 1, C8), lambda b, *_: (b, 0, 0))

    if use_fast:
        kernel = _make_vmem_gather_kernel(C, C8, D)
        in_specs = [pl.BlockSpec((V, D), lambda b, *_: (0, 0)),   # input table
                    pl.BlockSpec((V, D), lambda b, *_: (0, 0))]   # output table
        scratch = [pltpu.VMEM((C8, D), emb_output.dtype)]
        params = pltpu.CompilerParams(
            dimension_semantics=("parallel",),
            vmem_limit_bytes=32 * 1024 * 1024)
    else:
        kernel = _make_hbm_gather_kernel(C, C8, D)
        in_specs = [pl.BlockSpec(memory_space=pl.ANY),
                    pl.BlockSpec(memory_space=pl.ANY)]
        scratch = [pltpu.VMEM((1, D), emb_input.dtype),           # target row
                   pltpu.VMEM((C8, D), emb_output.dtype),         # context rows
                   pltpu.SemaphoreType.DMA((2,))]                 # shared sems
        params = pltpu.CompilerParams(dimension_semantics=("parallel",))

    grid_spec = pltpu.PrefetchScalarGridSpec(
        num_scalar_prefetch=2,                 # target ids + context ids -> SMEM
        grid=(B,),
        in_specs=in_specs,
        out_specs=out_spec,
        scratch_shapes=scratch)

    out = pl.pallas_call(
        kernel,
        out_shape=jax.ShapeDtypeStruct((B, 1, C8), jnp.float32),
        grid_spec=grid_spec,
        compiler_params=params,
    )(target_ids, context_ids, emb_input, emb_output)

    return out[:, 0, :C]                       # (B, C)


def word2vec_forward(target_id, context_ids, emb_input, emb_output):
    """Single-pair Pallas-backed equivalent of Word2VecABC.forward."""
    tgt = jnp.asarray(target_id, jnp.int32).reshape(1)
    ctx = jnp.asarray(context_ids, jnp.int32).reshape(1, -1)
    out = word2vec_forward_batched(tgt, ctx, emb_input, emb_output)
    return out[0]                              # (C,) — matches PyTorch return


class Word2Vec:
    """Minimal concrete Word2Vec with deterministic, in-script weight init."""

    def __init__(self, vocab_size: int, embedding_dim: int, key):
        self.vocab_size = vocab_size
        self.embedding_dim = embedding_dim
        k_in, k_out = jax.random.split(key)
        # Deterministic init (analogue of nn.Embedding's N(0, 1) init).
        self.embedding_input = jax.random.normal(
            k_in, (vocab_size, embedding_dim), jnp.float32)
        self.embedding_output = jax.random.normal(
            k_out, (vocab_size, embedding_dim), jnp.float32)

    def set_weights(self, weights_input, weights_output):
        self.embedding_input = jnp.asarray(weights_input)
        self.embedding_output = jnp.asarray(weights_output)

    def embed_input(self, *token_ids):
        return self.embedding_input[jnp.asarray(token_ids, jnp.int32)]

    def embed_output(self, *token_ids):
        return self.embedding_output[jnp.asarray(token_ids, jnp.int32)]

    def forward(self, target, context):
        return word2vec_forward(target, context,
                                self.embedding_input, self.embedding_output)

    def forward_batched(self, targets, contexts):
        return word2vec_forward_batched(targets, contexts,
                                        self.embedding_input,
                                        self.embedding_output)

    # TODO(synk): calculate_objective (softmax loss) is a training-only helper
    # with no forward-pass op to kernelize; left unimplemented.

    __call__ = forward


if __name__ == "__main__":
    key = jax.random.PRNGKey(0)
    k_emb, k_t, k_c = jax.random.split(key, 3)

    VOCAB, DIM, C, B = 512, 128, 8, 4
    model = Word2Vec(VOCAB, DIM, k_emb)

    # Keep ids on-device (no host-side int() sync).
    target_ids = jax.random.randint(k_t, (B,), 0, VOCAB, dtype=jnp.int32)
    context_ids = jax.random.randint(k_c, (B, C), 0, VOCAB, dtype=jnp.int32)

    # Pure-JAX reference.
    ref = jnp.einsum("bd,bcd->bc",
                     model.embedding_input[target_ids],
                     model.embedding_output[context_ids])

    # Batched, tables-in-VMEM fast path (default for this 512 KiB table pair).
    out_fast = jax.block_until_ready(model.forward_batched(target_ids, context_ids))
    assert out_fast.shape == (B, C)
    assert jnp.allclose(out_fast, ref, atol=1e-5, rtol=1e-5)

    # Batched, HBM row-gather path (forced; exercises the large-vocab kernel).
    out_slow = jax.block_until_ready(
        word2vec_forward_batched(target_ids, context_ids,
                                 model.embedding_input, model.embedding_output,
                                 force_hbm_gather=True))
    assert jnp.allclose(out_slow, ref, atol=1e-5, rtol=1e-5)

    # Single-pair module API (matches the PyTorch forward signature).
    out_single = jax.block_until_ready(model(target_ids[0], context_ids[0]))
    assert out_single.shape == (C,)
    assert jnp.allclose(out_single, ref[0], atol=1e-5, rtol=1e-5)

    print("KERNEL_OK")
</pallas_src>

<mosaic_0001>
module attributes {stable_mosaic.version = 11 : i64} {
  func.func @kernel(%arg0: i32, %arg1: memref<4xi32, #tpu.memory_space<smem>>, %arg2: memref<4x8xi32, #tpu.memory_space<smem>>, %arg3: memref<512x128xf32, #tpu.memory_space<vmem>>, %arg4: memref<512x128xf32, #tpu.memory_space<vmem>>, %arg5: memref<1x1x8xf32, #tpu.memory_space<vmem>>, %arg6: memref<8x128xf32, #tpu.memory_space<vmem>>) attributes {dimension_semantics = [#tpu.dimension_semantics<parallel>], iteration_bounds = array<i64: 4>, scalar_prefetch = 2 : i64, scratch_operands = 1 : i64, tpu.core_type = #tpu.core_type<tc>, window_params = [{pipeline_mode = #tpu.pipeline_mode<synchronous>, transform_indices = @transform_0, window_bounds = array<i64: 512, 128>}, {pipeline_mode = #tpu.pipeline_mode<synchronous>, transform_indices = @transform_1, window_bounds = array<i64: 512, 128>}, {transform_indices = @transform_2, window_bounds = array<i64: 1, 1, 8>}]} {
    %0 = arith.index_cast %arg0 : i32 to index
    %c0 = arith.constant 0 : index
    %1 = memref.load %arg2[%0, %c0] : memref<4x8xi32, #tpu.memory_space<smem>>
    %2 = arith.index_cast %1 : i32 to index
    %c0_0 = arith.constant 0 : index
    %3 = vector.load %arg4[%2, %c0_0] : memref<512x128xf32, #tpu.memory_space<vmem>>, vector<1x128xf32>
    %c0_1 = arith.constant 0 : index
    %c0_2 = arith.constant 0 : index
    %4 = vector.load %arg6[%c0_1, %c0_2] : memref<8x128xf32, #tpu.memory_space<vmem>>, vector<1x128xf32>
    tpu.vector_store %arg6[%c0_1, %c0_2], %3 {strides = array<i32>} : memref<8x128xf32, #tpu.memory_space<vmem>>, vector<1x128xf32>,
    %5 = arith.index_cast %arg0 : i32 to index
    %c1 = arith.constant 1 : index
    %6 = memref.load %arg2[%5, %c1] : memref<4x8xi32, #tpu.memory_space<smem>>
    %7 = arith.index_cast %6 : i32 to index
    %c0_3 = arith.constant 0 : index
    %8 = vector.load %arg4[%7, %c0_3] : memref<512x128xf32, #tpu.memory_space<vmem>>, vector<1x128xf32>
    %c1_4 = arith.constant 1 : index
    %c0_5 = arith.constant 0 : index
    %9 = vector.load %arg6[%c1_4, %c0_5] : memref<8x128xf32, #tpu.memory_space<vmem>>, vector<1x128xf32>
    tpu.vector_store %arg6[%c1_4, %c0_5], %8 {strides = array<i32>} : memref<8x128xf32, #tpu.memory_space<vmem>>, vector<1x128xf32>,
    %10 = arith.index_cast %arg0 : i32 to index
    %c2 = arith.constant 2 : index
    %11 = memref.load %arg2[%10, %c2] : memref<4x8xi32, #tpu.memory_space<smem>>
    %12 = arith.index_cast %11 : i32 to index
    %c0_6 = arith.constant 0 : index
    %13 = vector.load %arg4[%12, %c0_6] : memref<512x128xf32, #tpu.memory_space<vmem>>, vector<1x128xf32>
    %c2_7 = arith.constant 2 : index
    %c0_8 = arith.constant 0 : index
    %14 = vector.load %arg6[%c2_7, %c0_8] : memref<8x128xf32, #tpu.memory_space<vmem>>, vector<1x128xf32>
    tpu.vector_store %arg6[%c2_7, %c0_8], %13 {strides = array<i32>} : memref<8x128xf32, #tpu.memory_space<vmem>>, vector<1x128xf32>,
    %15 = arith.index_cast %arg0 : i32 to index
    %c3 = arith.constant 3 : index
    %16 = memref.load %arg2[%15, %c3] : memref<4x8xi32, #tpu.memory_space<smem>>
    %17 = arith.index_cast %16 : i32 to index
    %c0_9 = arith.constant 0 : index
    %18 = vector.load %arg4[%17, %c0_9] : memref<512x128xf32, #tpu.memory_space<vmem>>, vector<1x128xf32>
    %c3_10 = arith.constant 3 : index
    %c0_11 = arith.constant 0 : index
    %19 = vector.load %arg6[%c3_10, %c0_11] : memref<8x128xf32, #tpu.memory_space<vmem>>, vector<1x128xf32>
    tpu.vector_store %arg6[%c3_10, %c0_11], %18 {strides = array<i32>} : memref<8x128xf32, #tpu.memory_space<vmem>>, vector<1x128xf32>,
    %20 = arith.index_cast %arg0 : i32 to index
    %c4 = arith.constant 4 : index
    %21 = memref.load %arg2[%20, %c4] : memref<4x8xi32, #tpu.memory_space<smem>>
    %22 = arith.index_cast %21 : i32 to index
    %c0_12 = arith.constant 0 : index
    %23 = vector.load %arg4[%22, %c0_12] : memref<512x128xf32, #tpu.memory_space<vmem>>, vector<1x128xf32>
    %c4_13 = arith.constant 4 : index
    %c0_14 = arith.constant 0 : index
    %24 = vector.load %arg6[%c4_13, %c0_14] : memref<8x128xf32, #tpu.memory_space<vmem>>, vector<1x128xf32>
    tpu.vector_store %arg6[%c4_13, %c0_14], %23 {strides = array<i32>} : memref<8x128xf32, #tpu.memory_space<vmem>>, vector<1x128xf32>,
    %25 = arith.index_cast %arg0 : i32 to index
    %c5 = arith.constant 5 : index
    %26 = memref.load %arg2[%25, %c5] : memref<4x8xi32, #tpu.memory_space<smem>>
    %27 = arith.index_cast %26 : i32 to index
    %c0_15 = arith.constant 0 : index
    %28 = vector.load %arg4[%27, %c0_15] : memref<512x128xf32, #tpu.memory_space<vmem>>, vector<1x128xf32>
    %c5_16 = arith.constant 5 : index
    %c0_17 = arith.constant 0 : index
    %29 = vector.load %arg6[%c5_16, %c0_17] : memref<8x128xf32, #tpu.memory_space<vmem>>, vector<1x128xf32>
    tpu.vector_store %arg6[%c5_16, %c0_17], %28 {strides = array<i32>} : memref<8x128xf32, #tpu.memory_space<vmem>>, vector<1x128xf32>,
    %30 = arith.index_cast %arg0 : i32 to index
    %c6 = arith.constant 6 : index
    %31 = memref.load %arg2[%30, %c6] : memref<4x8xi32, #tpu.memory_space<smem>>
    %32 = arith.index_cast %31 : i32 to index
    %c0_18 = arith.constant 0 : index
    %33 = vector.load %arg4[%32, %c0_18] : memref<512x128xf32, #tpu.memory_space<vmem>>, vector<1x128xf32>
    %c6_19 = arith.constant 6 : index
    %c0_20 = arith.constant 0 : index
    %34 = vector.load %arg6[%c6_19, %c0_20] : memref<8x128xf32, #tpu.memory_space<vmem>>, vector<1x128xf32>
    tpu.vector_store %arg6[%c6_19, %c0_20], %33 {strides = array<i32>} : memref<8x128xf32, #tpu.memory_space<vmem>>, vector<1x128xf32>,
    %35 = arith.index_cast %arg0 : i32 to index
    %c7 = arith.constant 7 : index
    %36 = memref.load %arg2[%35, %c7] : memref<4x8xi32, #tpu.memory_space<smem>>
    %37 = arith.index_cast %36 : i32 to index
    %c0_21 = arith.constant 0 : index
    %38 = vector.load %arg4[%37, %c0_21] : memref<512x128xf32, #tpu.memory_space<vmem>>, vector<1x128xf32>
    %c7_22 = arith.constant 7 : index
    %c0_23 = arith.constant 0 : index
    %39 = vector.load %arg6[%c7_22, %c0_23] : memref<8x128xf32, #tpu.memory_space<vmem>>, vector<1x128xf32>
    tpu.vector_store %arg6[%c7_22, %c0_23], %38 {strides = array<i32>} : memref<8x128xf32, #tpu.memory_space<vmem>>, vector<1x128xf32>,
    %40 = arith.index_cast %arg0 : i32 to index
    %41 = memref.load %arg1[%40] : memref<4xi32, #tpu.memory_space<smem>>
    %42 = arith.index_cast %41 : i32 to index
    %c0_24 = arith.constant 0 : index
    %43 = vector.load %arg3[%42, %c0_24] : memref<512x128xf32, #tpu.memory_space<vmem>>, vector<1x128xf32>
    %c0_25 = arith.constant 0 : index
    %c0_26 = arith.constant 0 : index
    %44 = vector.load %arg6[%c0_25, %c0_26] : memref<8x128xf32, #tpu.memory_space<vmem>>, vector<8x128xf32>
    %cst = arith.constant dense<0.000000e+00> : vector<1x8xf32>
    %45 = tpu.matmul %43, %44, %cst {dimension_numbers = #tpu.dot_dimension_numbers<[1], [1], [0], [0], [0, 0, 1, 0], [], []>} : vector<1x128xf32>, vector<8x128xf32>, vector<1x8xf32> -> vector<1x8xf32>
    %c0_27 = arith.constant 0 : index
    %c0_28 = arith.constant 0 : index
    %c0_29 = arith.constant 0 : index
    %46 = vector.load %arg5[%c0_27, %c0_28, %c0_29] : memref<1x1x8xf32, #tpu.memory_space<vmem>>, vector<1x1x8xf32>
    %47 = vector.shape_cast %46 : vector<1x1x8xf32> to vector<1x8xf32>
    %48 = vector.shape_cast %45 : vector<1x8xf32> to vector<1x1x8xf32>
    tpu.vector_store %arg5[%c0_27, %c0_28, %c0_29], %48 {strides = array<i32>} : memref<1x1x8xf32, #tpu.memory_space<vmem>>, vector<1x1x8xf32>,
    return
  }
  func.func @transform_0(%arg0: i32, %arg1: memref<4xi32, #tpu.memory_space<smem>>, %arg2: memref<4x8xi32, #tpu.memory_space<smem>>) -> (i32, i32) {
    %c0_i32 = arith.constant 0 : i32
    %c0_i32_0 = arith.constant 0 : i32
    %c0_i32_1 = arith.constant 0 : i32
    return %c0_i32, %c0_i32_0 : i32, i32
  }
  func.func @transform_1(%arg0: i32, %arg1: memref<4xi32, #tpu.memory_space<smem>>, %arg2: memref<4x8xi32, #tpu.memory_space<smem>>) -> (i32, i32) {
    %c0_i32 = arith.constant 0 : i32
    %c0_i32_0 = arith.constant 0 : i32
    %c0_i32_1 = arith.constant 0 : i32
    return %c0_i32, %c0_i32_0 : i32, i32
  }
  func.func @transform_2(%arg0: i32, %arg1: memref<4xi32, #tpu.memory_space<smem>>, %arg2: memref<4x8xi32, #tpu.memory_space<smem>>) -> (i32, i32, i32) {
    %c0_i32 = arith.constant 0 : i32
    %c0_i32_0 = arith.constant 0 : i32
    %c0_i32_1 = arith.constant 0 : i32
    return %arg0, %c0_i32, %c0_i32_0 : i32, i32, i32
  }
}

</mosaic_0001>

<llo_original>
// kernel: tpu_custom_call.1
$region0: #{tpu_custom_call.1}
  #allocation0 [shape = 'u32[]', space=smem, size = 0x4, offset = 0x4, fixed_abs, tag = 'smem constant byte address 0x4 - core index']
  #allocation1 [shape = 'u32[144,128]{1,0:T(1,128)}', space=vmem, size = 0x12000, scoped, tag = 'internal scratch']
  #allocation2 [shape = 'f32[8,128]{1,0:T(8,128)}', space=vmem, size = 0x1000, scoped, tag = 'scratch operand']
  #allocation3 [shape = 's32[1]{0}', space=sflag, size = 0x4, scoped, tag = 'scoped memory for tpu_custom_call.1']
  #allocation4 [shape = 'u8[512]{0}', space=smem, size = 0x200, scoped, tag = 'prefetched SMEM operand 0']
  #allocation5 [shape = 'u8[2048]{0}', space=smem, size = 0x800, scoped, tag = 'prefetched SMEM operand 1']
  %s0 = inlined_call_operand.hbm [shape: s32[4], index: 0, kind: input, shape index: {}]
  %s1 = inlined_call_operand.hbm [shape: s32[4,8], index: 1, kind: input, shape index: {}]
  %s2 = inlined_call_operand.hbm [shape: f32[512,128], index: 2, kind: input, shape index: {}]
  %s3 = inlined_call_operand.hbm [shape: f32[512,128], index: 3, kind: input, shape index: {}]
  %s4 = inlined_call_operand.hbm [shape: f32[4,1,8], index: 4, kind: output, shape index: {}]
  %s5 = sld [smem:[#allocation0]]
  $region49: #{tpu_custom_call.1} parent=0
    _
  %s7 = ssub.s32 1, %s5
  %s8 = scalar_select 0, %s7, %s5
  %10 = dma.hbm_to_smem %s0, 16, [#allocation4], [#allocation3]
  %12 = dma.hbm_to_smem %s1, 64, [#allocation5], [#allocation3]
  %13 = dma.done [#allocation3], 80
  %14 = sfence
  $region1: #{tpu_custom_call.1} parent=0
    #allocation6 [shape = 'u8[262144]{0}', space=vmem, size = 0x40000, scoped, tag = 'input window, operand 2, single buffered']
    #allocation7 [shape = 's32[2]{0}', space=sflag, size = 0x8, scoped, tag = 'scoped memory for tpu_custom_call.1']
    #allocation8 [shape = 's32[2]{0}', space=sflag, size = 0x8, scoped, tag = 'scoped memory for tpu_custom_call.1']
    #allocation9 [shape = 'u8[262144]{0}', space=vmem, size = 0x40000, scoped, tag = 'input window, operand 3, single buffered']
    #allocation10 [shape = 's32[1]{0}', space=sflag, size = 0x4, scoped, tag = 'scoped memory for tpu_custom_call.1']
    #allocation11 [shape = 'u8[1024]{0}', space=vmem, size = 0x400, scoped, tag = 'output window, operand 0']
    %15 = vsyncpa [#allocation7], 0
    %16 = vsyncpa [#allocation10], 0
    %17 = vsyncpa [#allocation8], 0
    %s18 = scalar_lea.sflag [#allocation8], 1
    %19 = vsyncpa %s18, 0
    loop: start=0, step=1, limit=6
    $region2: #{tpu_custom_call.1} parent=1 // loop_pre_header
      _
    $region3: #{tpu_custom_call.1} parent=1 // loop_header
      %s21 = sphi 0, %s25
      %p22 = scmp.ge.s32.totalorder %s21, 6
      %s29 = sphi 0, %s29
      %s31 = sphi 0, %s29
      %s32 = sphi 0, %s31
      %s46 = sphi 0, %s32
      %s50 = sphi 0, %s50
      %s52 = sphi 0, %s50
      %s53 = sphi 0, %s52
      %s67 = sphi 0, %s53
      %s73 = sphi 0, %s75
      %s76 = sphi 0, %s73
      %s77 = sphi 0, %s76
      %s93 = sphi 0, %s77
    $region4: #{tpu_custom_call.1} parent=1 // loop_header_branch
      %24 = sbr.rel (%p22) target = $region8
    $region5: #{tpu_custom_call.1} parent=1 // loop_body
      %s26 = ssub.s32 %s21, 1
      %s27 = ssub.s32 %s21, 2
      %s28 = sadd.s32 %s21, 1
      %s30 = sadd.s32 %s29, 1
      %p33 = scmp.eq.s32.totalorder %s21, 3
      %p34 = scmp.ne.s32.totalorder %s29, %s31
      %p35 = scmp.eq.s32.totalorder %s21, 0
      %p36 = por %p34, %p35
      %p37 = scmp.ne.s32.totalorder %s29, %s31
      %p38 = scmp.eq.s32.totalorder %s26, 3
      %p39 = por %p37, %p38
      %p40 = scmp.ne.s32.totalorder %s31, %s32
      %p41 = scmp.eq.s32.totalorder %s26, 0
      %p42 = por %p40, %p41
      %p43 = scmp.ne.s32.totalorder %s31, %s32
      %p44 = scmp.eq.s32.totalorder %s27, 3
      %p45 = por %p43, %p44
      %p47 = scmp.ne.s32.totalorder %s32, %s46
      %p48 = scmp.eq.s32.totalorder %s27, 0
      %p49 = por %p47, %p48
      %s51 = sadd.s32 %s50, 1
      %p54 = scmp.eq.s32.totalorder %s21, 3
      %p55 = scmp.ne.s32.totalorder %s50, %s52
      %p56 = scmp.eq.s32.totalorder %s21, 0
      %p57 = por %p55, %p56
      %p58 = scmp.ne.s32.totalorder %s50, %s52
      %p59 = scmp.eq.s32.totalorder %s26, 3
      %p60 = por %p58, %p59
      %p61 = scmp.ne.s32.totalorder %s52, %s53
      %p62 = scmp.eq.s32.totalorder %s26, 0
      %p63 = por %p61, %p62
      %p64 = scmp.ne.s32.totalorder %s52, %s53
      %p65 = scmp.eq.s32.totalorder %s27, 3
      %p66 = por %p64, %p65
      %p68 = scmp.ne.s32.totalorder %s53, %s67
      %p69 = scmp.eq.s32.totalorder %s27, 0
      %p70 = por %p68, %p69
      %s71 = ssub.s32 %s21, %s28
      %p72 = scmp.eq.s32.totalorder %s71, 0
      %s74 = sadd.s32 %s73, 1
      %s75 = scalar_select %p72, %s73, %s74
      %p78 = pneg %p72
      %p79 = scmp.eq.s32.totalorder %s21, 3
      %p80 = por %p78, %p79
      %p81 = scmp.ne.s32.totalorder %s73, %s76
      %p82 = scmp.eq.s32.totalorder %s21, 0
      %p83 = por %p81, %p82
      %p84 = scmp.ne.s32.totalorder %s73, %s76
      %p85 = scmp.eq.s32.totalorder %s26, 3
      %p86 = por %p84, %p85
      %p87 = scmp.ne.s32.totalorder %s76, %s77
      %p88 = scmp.eq.s32.totalorder %s26, 0
      %p89 = por %p87, %p88
      %p90 = scmp.ne.s32.totalorder %s76, %s77
      %p91 = scmp.eq.s32.totalorder %s27, 3
      %p92 = por %p90, %p91
      %p94 = scmp.ne.s32.totalorder %s77, %s93
      %p95 = scmp.eq.s32.totalorder %s27, 0
      %p96 = por %p94, %p95
      %p97 = scmp.le.s32.totalorder 1, %s21
      %p98 = scmp.lt.s32.totalorder %s21, 5
      %p99 = pnand %p97, %p98
      %p100 = pneg %p99
      // Predicated region
      $region9: #{tpu_custom_call.1} parent=5 // pred_check
        _
      $region10: #{tpu_custom_call.1} parent=5 // pred_check_branch
        %102 = sbr.rel (%p99) target = $region12
      $region11: #{tpu_custom_call.1} parent=5 // pred_region
        %s103 = ssub.s32 %s21, 1
        // Predicated region
        $region13: #{tpu_custom_call.1} parent=11 // pred_check
          %p104 = pneg %p42
        $region14: #{tpu_custom_call.1} parent=11 // pred_check_branch
          %106 = sbr.rel (%p104) target = $region16
        $region15: #{tpu_custom_call.1} parent=11 // pred_region
          %s108 = ssub.s32 8192, 8192
          %109 = vsyncadd [#allocation7], %s108
          %s110 = sshll.u32 [#allocation6], 4
          %s111 = int_to_ptr.vmem [resolvable:$true] %s110
          %116 = dma.hbm_to_vmem [thread:$0]  %s2, 8192, %s111, [#allocation7], 128, 128, 8
        $region16: #{tpu_custom_call.1} parent=11 // pred_fallthru
          _
        // Predicated region
        $region17: #{tpu_custom_call.1} parent=11 // pred_check
          %p117 = pneg %p63
        $region18: #{tpu_custom_call.1} parent=11 // pred_check_branch
          %119 = sbr.rel (%p117) target = $region20
        $region19: #{tpu_custom_call.1} parent=11 // pred_region
          %s121 = ssub.s32 8192, 8192
          %122 = vsyncadd [#allocation10], %s121
          %s123 = sshll.u32 [#allocation9], 4
          %s124 = int_to_ptr.vmem [resolvable:$true] %s123
          %129 = dma.hbm_to_vmem [thread:$0]  %s3, 8192, %s124, [#allocation10], 128, 128, 8
        $region20: #{tpu_custom_call.1} parent=11 // pred_fallthru
          _
      $region12: #{tpu_custom_call.1} parent=5 // pred_fallthru
        _
      %p130 = scmp.lt.s32.totalorder %s21, 4
      // Predicated region
      $region21: #{tpu_custom_call.1} parent=5 // pred_check
        %p131 = pneg %p130
      $region22: #{tpu_custom_call.1} parent=5 // pred_check_branch
        %133 = sbr.rel (%p131) target = $region24
      $region23: #{tpu_custom_call.1} parent=5 // pred_region
        _
      $region24: #{tpu_custom_call.1} parent=5 // pred_fallthru
        _
      %p134 = scmp.le.s32.totalorder 1, %s21
      %p135 = scmp.lt.s32.totalorder %s21, 5
      %p136 = pnand %p134, %p135
      %p137 = pneg %p136
      // Predicated region
      $region25: #{tpu_custom_call.1} parent=5 // pred_check
        _
      $region26: #{tpu_custom_call.1} parent=5 // pred_check_branch
        %139 = sbr.rel (%p136) target = $region28
      $region27: #{tpu_custom_call.1} parent=5 // pred_region
        %s140 = ssub.s32 %s21, 1
        // Predicated region
        $region29: #{tpu_custom_call.1} parent=27 // pred_check
          %p141 = pneg %p42
        $region30: #{tpu_custom_call.1} parent=27 // pred_check_branch
          %143 = sbr.rel (%p141) target = $region32
        $region31: #{tpu_custom_call.1} parent=27 // pred_region
          %144 = dma.done [#allocation7], 8192
        $region32: #{tpu_custom_call.1} parent=27 // pred_fallthru
          _
        // Predicated region
        $region33: #{tpu_custom_call.1} parent=27 // pred_check
          %p145 = pneg %p63
        $region34: #{tpu_custom_call.1} parent=27 // pred_check_branch
          %147 = sbr.rel (%p145) target = $region36
        $region35: #{tpu_custom_call.1} parent=27 // pred_region
          %148 = dma.done [#allocation10], 8192
        $region36: #{tpu_custom_call.1} parent=27 // pred_fallthru
          _
        %p149 = pneg %p42
        %p150 = pneg %p39
        %p151 = pneg %p63
        %p152 = pneg %p60
        %p153 = pneg %p89
        %p154 = pneg %p86
        %s155 = sand.u32 %s76, 1
        %s156 = scalar_lea.sflag [#allocation8], %s155
        %s157 = sand.u32 %s76, 1
        %s158 = scalar_lea.vmem [#allocation11], %s157
        %s159 = smul.u32 %s26, 128
        %s160 = sld [smem:[#allocation5 + %s159]]
        %s161 = scalar_lea.vmem [#allocation9], %s160
        %v162 = vld [vmem:[%s161] sm:$0x1]
        %163 = vst [vmem:[#allocation2] sm:$0x1] %v162
        %s164 = sadd.s32 %s159, 1
        %s165 = sld [smem:[#allocation5 + %s164]]
        %s166 = scalar_lea.vmem [#allocation9], %s165
        %v167 = vld [vmem:[%s166] sm:$0x1]
        %168 = vst [vmem:[#allocation2 + $0x1] sm:$0x1] %v167
        %s169 = sadd.s32 %s159, 2
        %s170 = sld [smem:[#allocation5 + %s169]]
        %s171 = scalar_lea.vmem [#allocation9], %s170
        %v172 = vld [vmem:[%s171] sm:$0x1]
        %173 = vst [vmem:[#allocation2 + $0x2] sm:$0x1] %v172
        %s174 = sadd.s32 %s159, 3
        %s175 = sld [smem:[#allocation5 + %s174]]
        %s176 = scalar_lea.vmem [#allocation9], %s175
        %v177 = vld [vmem:[%s176] sm:$0x1]
        %178 = vst [vmem:[#allocation2 + $0x3] sm:$0x1] %v177
        %s179 = sadd.s32 %s159, 4
        %s180 = sld [smem:[#allocation5 + %s179]]
        %s181 = scalar_lea.vmem [#allocation9], %s180
        %v182 = vld [vmem:[%s181] sm:$0x1]
        %183 = vst [vmem:[#allocation2 + $0x4] sm:$0x1] %v182
        %s184 = sadd.s32 %s159, 5
        %s185 = sld [smem:[#allocation5 + %s184]]
        %s186 = scalar_lea.vmem [#allocation9], %s185
        %v187 = vld [vmem:[%s186] sm:$0x1]
        %188 = vst [vmem:[#allocation2 + $0x5] sm:$0x1] %v187
        %s189 = sadd.s32 %s159, 6
        %s190 = sld [smem:[#allocation5 + %s189]]
        %s191 = scalar_lea.vmem [#allocation9], %s190
        %v192 = vld [vmem:[%s191] sm:$0x1]
        %193 = vst [vmem:[#allocation2 + $0x6] sm:$0x1] %v192
        %s194 = sadd.s32 %s159, 7
        %s195 = sld [smem:[#allocation5 + %s194]]
        %s196 = scalar_lea.vmem [#allocation9], %s195
        %v197 = vld [vmem:[%s196] sm:$0x1]
        %198 = vst [vmem:[#allocation2 + $0x7] sm:$0x1] %v197
        %s199 = sld [smem:[#allocation4 + %s26]]
        %s200 = scalar_lea.vmem [#allocation6], %s199
        %v201 = vld [vmem:[%s200] sm:$0x1]
        %v202 = vld [vmem:[#allocation2] sm:$0xff]
        %203 = vmatprep.subr.mxu0 0.0
        %204 = vmatpush1.xpose.msra.mxu0 %v202
        %205 = vmatprep.subr.mxu0 0.0
        %206 = vmatpush1.xpose.msra.mxu0 0.0
        %207 = vmatprep.subr.mxu0 0.0
        %208 = vmatpush1.xpose.msra.mxu0 0.0
        %209 = vmatprep.subr.mxu0 0.0
        %210 = vmatpush1.xpose.msra.mxu0 0.0
        %211 = vmatprep.subr.mxu0 0.0
        %212 = vmatpush1.xpose.msra.mxu0 0.0
        %213 = vmatprep.subr.mxu0 0.0
        %214 = vmatpush1.xpose.msra.mxu0 0.0
        %215 = vmatprep.subr.mxu0 0.0
        %216 = vmatpush1.xpose.msra.mxu0 0.0
        %217 = vmatprep.subr.mxu0 0.0
        %218 = vmatpush1.xpose.msra.mxu0 0.0
        %219 = vmatprep.subr.mxu0 0.0
        %220 = vmatpush1.xpose.msra.mxu0 0.0
        %221 = vmatprep.subr.mxu0 0.0
        %222 = vmatpush1.xpose.msra.mxu0 0.0
        %223 = vmatprep.subr.mxu0 0.0
        %224 = vmatpush1.xpose.msra.mxu0 0.0
        %225 = vmatprep.subr.mxu0 0.0
        %226 = vmatpush1.xpose.msra.mxu0 0.0
        %227 = vmatprep.subr.mxu0 0.0
        %228 = vmatpush1.xpose.msra.mxu0 0.0
        %229 = vmatprep.subr.mxu0 0.0
        %230 = vmatpush1.xpose.msra.mxu0 0.0
        %231 = vmatprep.subr.mxu0 0.0
        %232 = vmatpush1.xpose.msra.mxu0 0.0
        %233 = vmatprep.subr.mxu0 0.0
        %234 = vmatpush1.xpose.msra.mxu0 0.0
        %235 = vmatprep.subr.mxu0 0.0
        %236 = vmatpush1.xpose.msra.mxu0 0.0
        %237 = vmatprep.subr.mxu0 0.0
        %238 = vmatpush1.xpose.msra.mxu0 0.0
        %239 = vmatprep.subr.mxu0 0.0
        %240 = vmatpush1.xpose.msra.mxu0 0.0
        %241 = vmatprep.subr.mxu0 0.0
        %242 = vmatpush1.xpose.msra.mxu0 0.0
        %243 = vmatprep.subr.mxu0 0.0
        %244 = vmatpush1.xpose.msra.mxu0 0.0
        %245 = vmatprep.subr.mxu0 0.0
        %246 = vmatpush1.xpose.msra.mxu0 0.0
        %247 = vmatprep.subr.mxu0 0.0
        %248 = vmatpush1.xpose.msra.mxu0 0.0
        %249 = vmatprep.subr.mxu0 0.0
        %250 = vmatpush1.xpose.msra.mxu0 0.0
        %251 = vmatprep.subr.mxu0 0.0
        %252 = vmatpush1.xpose.msra.mxu0 0.0
        %253 = vmatprep.subr.mxu0 0.0
        %254 = vmatpush1.xpose.msra.mxu0 0.0
        %255 = vmatprep.subr.mxu0 0.0
        %256 = vmatpush1.xpose.msra.mxu0 0.0
        %257 = vmatprep.subr.mxu0 0.0
        %258 = vmatpush1.xpose.msra.mxu0 0.0
        %259 = vmatprep.subr.mxu0 0.0
        %260 = vmatpush1.xpose.msra.mxu0 0.0
        %261 = vmatprep.subr.mxu0 0.0
        %262 = vmatpush1.xpose.msra.mxu0 0.0
        %263 = vmatprep.subr.mxu0 0.0
        %264 = vmatpush1.xpose.msra.mxu0 0.0
        %265 = vmatprep.subr.mxu0 0.0
        %266 = vmatpush1.xpose.msra.mxu0 0.0
        %267 = vmatprep.mubr.f32.mxu0 0.0
        %268 = vmatmul.mubr.f32.gmra.mrb[0].mxu0 %v201
        %v269 = vpop.f32.mrb[0].mxu0
        %v270 = vadd.f32 0.0, %v269
        %v271 = vpop.f32.mrb[0].mxu0
        %272 = vdwg.mxu0
        %vm273 = vcmask 57344
        %274 = vst.msk [vmem:[%s158] sm:$0x1] %vm273, %v270
        %s275 = sand.u32 %s76, 1
        %s276 = scalar_lea.sflag [#allocation8], %s275
        %s277 = sand.u32 %s76, 1
        %s278 = scalar_lea.vmem [#allocation11], %s277
        // Predicated region
        $region37: #{tpu_custom_call.1} parent=27 // pred_check
          %p279 = pneg %p86
        $region38: #{tpu_custom_call.1} parent=27 // pred_check_branch
          %281 = sbr.rel (%p279) target = $region40
        $region39: #{tpu_custom_call.1} parent=27 // pred_region
          %s283 = ssub.s32 16, 16
          %284 = vsyncadd %s276, %s283
          %s285 = smul.addr %s26, 16
          %s286 = scalar_lea.hbm %s4, %s285
          %s288 = sshll.u32 %s278, 4
          %s289 = int_to_ptr.vmem [resolvable:$true] %s288
          %291 = dma.vmem_to_hbm [thread:$0]  %s289, 16, %s286, %s276
        $region40: #{tpu_custom_call.1} parent=27 // pred_fallthru
          _
      $region28: #{tpu_custom_call.1} parent=5 // pred_fallthru
        _
      %p292 = scmp.le.s32.totalorder 2, %s21
      // Predicated region
      $region41: #{tpu_custom_call.1} parent=5 // pred_check
        %p293 = pneg %p292
      $region42: #{tpu_custom_call.1} parent=5 // pred_check_branch
        %295 = sbr.rel (%p293) target = $region44
      $region43: #{tpu_custom_call.1} parent=5 // pred_region
        %s296 = ssub.s32 %s21, 2
        // Predicated region
        $region45: #{tpu_custom_call.1} parent=43 // pred_check
          %p297 = pneg %p92
        $region46: #{tpu_custom_call.1} parent=43 // pred_check_branch
          %299 = sbr.rel (%p297) target = $region48
        $region47: #{tpu_custom_call.1} parent=43 // pred_region
          %s300 = sand.u32 %s77, 1
          %s301 = scalar_lea.sflag [#allocation8], %s300
          %s302 = sand.u32 %s77, 1
          %s303 = scalar_lea.vmem [#allocation11], %s302
          %304 = dma.done %s301, 16
        $region48: #{tpu_custom_call.1} parent=43 // pred_fallthru
          _
      $region44: #{tpu_custom_call.1} parent=5 // pred_fallthru
        _
    $region6: #{tpu_custom_call.1} parent=1 // loop_footer
      %s25 = sadd.s32 1, %s21
    $region7: #{tpu_custom_call.1} parent=1 // loop_footer_branch
      %20 = sbr.rel target = $region3
    $region8: #{tpu_custom_call.1} parent=1 // loop_exit
      _
    %305 = vsyncpa [#allocation7], 1
    %s306 = scalar_lea.sflag [#allocation7], 1
    %307 = vsyncpa %s306, 1
    %308 = vsyncpa [#allocation10], 1
    %309 = vsyncpa [#allocation8], 1
    %s310 = scalar_lea.sflag [#allocation8], 1
    %311 = vsyncpa %s310, 1

</llo_original>
